<compile_context>
chip_gen: v7x
topology: tpu7x:2x2x1
jax: 0.10.0
libtpu: 0.0.40
codegen_flags: <defaults>
</compile_context>

<pallas_src>
import jax
import jax.numpy as jnp
import numpy as np
from jax import lax
from jax.experimental import pallas as pl
from jax.experimental.pallas import tpu as pltpu

_LN_EPS = 1e-5


def _layer_norm_f32(x_f32, lnw_f32, lnb_f32):
    mu = jnp.mean(x_f32, axis=-1, keepdims=True)
    xc = x_f32 - mu
    var = jnp.mean(xc * xc, axis=-1, keepdims=True)
    return xc * lax.rsqrt(var + _LN_EPS) * lnw_f32 + lnb_f32


def _ffn_kernel(x_ref, prevn_ref, xk_ref, lnw_ref, lnb_ref, kwT_ref, vwT_ref,
                out_ref, stout_ref, xk_scr, acc_scr):
    # All pallas grid primitives hoisted to top level (never inside pl.when bodies).
    i_i = pl.program_id(1)
    n_i = pl.num_programs(1)
    is_first = i_i == 0
    is_last = i_i == n_i - 1

    # ---- prologue: LN + time shift + xk, once per seq tile --------------------
    @pl.when(is_first)
    def _prologue():
        x = x_ref[...].astype(jnp.float32)                     # [tS, H]
        lnw = lnw_ref[...].astype(jnp.float32)                 # [1, H]
        lnb = lnb_ref[...].astype(jnp.float32)                 # [1, H]
        ln = _layer_norm_f32(x, lnw, lnb)                      # [tS, H]

        # per-tile shift state = last normalized row (wrapper keeps last tile's)
        stout_ref[...] = ln[-1:, :].astype(stout_ref.dtype)

        # time shift: past[0] = normalized halo row (or incoming state for tile 0),
        # past[i] = ln[i-1] for i >= 1.
        prev = prevn_ref[...].astype(jnp.float32)              # [1, H]
        past = jnp.concatenate([prev, ln[:-1, :]], axis=0)     # [tS, H]

        xk_p = xk_ref[...].astype(jnp.float32)                 # [1, H]
        xk_scr[...] = (ln + (past - ln) * xk_p).astype(xk_scr.dtype)

    # ---- blocked reduction over the intermediate dim (native MXU [M,K]x[K,N]) --
    k = jnp.dot(xk_scr[...], kwT_ref[...],
                preferred_element_type=jnp.float32)            # [tS, tI]
    k = jnp.maximum(k, 0.0)
    k = k * k
    part = jnp.dot(k.astype(vwT_ref.dtype), vwT_ref[...],
                   preferred_element_type=jnp.float32)         # [tS, H]

    @pl.when(is_first)
    def _store():
        acc_scr[...] = part

    @pl.when(i_i != 0)
    def _accumulate():
        acc_scr[...] += part

    # ---- epilogue: residual add, write out ------------------------------------
    @pl.when(is_last)
    def _epilogue():
        out_ref[...] = (acc_scr[...] + x_ref[...].astype(jnp.float32)).astype(out_ref.dtype)


def _tpu_vmem_capacity():
    try:
        info = pltpu.get_tpu_info()
        cap = int(getattr(info, "vmem_capacity_bytes", 0))
        return cap if cap > 0 else None
    except Exception:
        return None


def _estimate_vmem_bytes(tS, tI, H, x_bytes, w_bytes):
    xio = 2 * 2 * tS * H * x_bytes          # x in + out tiles, double-buffered
    wts = 2 * 2 * tI * H * w_bytes          # two weight tiles, double-buffered
    scr = tS * H * (w_bytes + 4)            # xk_scr + f32 accumulator
    mid = tS * tI * 4                       # [tS, tI] f32 relu^2 intermediate
    return xio + wts + scr + mid + (2 << 20)  # slack for params / compiler scratch


def _choose_tiles(S, I, H, x_bytes, w_bytes, budget, small_vmem):
    ts_max = 512 if small_vmem else 1024     # v7x: keep tiles modest (64 MiB / TC)
    ti_max = 512 if small_vmem else 1024
    ts_opts = [c for c in (1024, 512, 256, 128, 64, 32, 16, 8)
               if c <= ts_max and c <= S and S % c == 0] or [S]
    ti_opts = [c for c in (1024, 512, 256, 128)
               if c <= ti_max and c <= I and I % c == 0] or [I]
    if small_vmem:
        # keep >= 2 seq tiles so the "parallel" axis shards across v7x's two TCs
        halved = [c for c in ts_opts if 2 * c <= S]
        if halved:
            ts_opts = halved
    for tS in ts_opts:                       # largest first
        for tI in ti_opts:
            if _estimate_vmem_bytes(tS, tI, H, x_bytes, w_bytes) <= budget:
                return tS, tI
    return ts_opts[-1], ti_opts[-1]


def rwkv7_ffn_pallas(x, state, x_k, ln_w, ln_b, key_w, value_w, *,
                     ts=None, ti=None, weight_dtype=jnp.bfloat16):
    """x: [1, S, H]; state: [1, 1, H]; key_w: [I, H]; value_w: [H, I].

    Returns (out [1, S, H], state_out [1, 1, H]).
    Weights are transposed/cast ONCE here (jit constant-folds for params); bf16 is
    the default production weight dtype, accumulation is f32 regardless.
    """
    assert x.shape[0] == 1, "kernel implements the batch==1 path (as the module asserts)"
    _, S, H = x.shape
    I, Hk = key_w.shape
    assert Hk == H and value_w.shape == (H, I)

    w_dtype = jnp.dtype(weight_dtype) if weight_dtype is not None else jnp.dtype(key_w.dtype)
    kwT = jnp.asarray(key_w, w_dtype).T        # [H, I]  (native [M,K]x[K,N] form)
    vwT = jnp.asarray(value_w, w_dtype).T      # [I, H]

    # Generation-aware VMEM limit (v5e/v6e: 128 MiB physical; v7x: 64 MiB per TC).
    cap = _tpu_vmem_capacity()
    if cap is None:
        cap = 128 << 20
    small_vmem = cap <= (64 << 20)
    vmem_limit = int(min(max(cap - cap // 4, 32 << 20), 112 << 20))

    if ts is None or ti is None:
        a_ts, a_ti = _choose_tiles(S, I, H, jnp.dtype(x.dtype).itemsize,
                                   w_dtype.itemsize,
                                   budget=int(vmem_limit * 0.9),
                                   small_vmem=small_vmem)
        tS = ts if ts is not None else a_ts
        tI = ti if ti is not None else a_ti
    else:
        tS, tI = ts, ti
    assert S % tS == 0 and I % tI == 0
    nS, nI = S // tS, I // tI

    x2 = x.reshape(S, H)
    xk2 = x_k.reshape(1, H).astype(jnp.float32)
    lnw2 = ln_w.reshape(1, H).astype(jnp.float32)
    lnb2 = ln_b.reshape(1, H).astype(jnp.float32)

    # 1-row *normalized* halo per seq tile: row 0 = incoming shift state (already
    # normalized by the previous step per the module's recurrence); row s>0 =
    # LayerNorm of the last raw row of tile s-1. Tiny wrapper-side compute; keeps
    # seq tiles fully independent (no cross-tile dependency, no in-kernel blend).
    prev_raw = x2[tS - 1::tS, :][:nS - 1].astype(jnp.float32)          # [nS-1, H]
    prev_ln = _layer_norm_f32(prev_raw, lnw2, lnb2)                    # [nS-1, H]
    prevn = jnp.concatenate([state.reshape(1, H).astype(jnp.float32), prev_ln], axis=0)
    prevn = prevn.reshape(nS, 1, H)

    out, stout_all = pl.pallas_call(
        _ffn_kernel,
        out_shape=(jax.ShapeDtypeStruct((S, H), x.dtype),
                   jax.ShapeDtypeStruct((nS, 1, H), x.dtype)),
        grid=(nS, nI),
        in_specs=[
            pl.BlockSpec((tS, H), lambda s, i: (s, 0)),              # x tile
            pl.BlockSpec((None, 1, H), lambda s, i: (s, 0, 0)),      # normalized halo row
            pl.BlockSpec((1, H), lambda s, i: (0, 0)),               # x_k
            pl.BlockSpec((1, H), lambda s, i: (0, 0)),               # ln2.weight
            pl.BlockSpec((1, H), lambda s, i: (0, 0)),               # ln2.bias
            pl.BlockSpec((H, tI), lambda s, i: (0, i)),              # key.weight^T tile
            pl.BlockSpec((tI, H), lambda s, i: (i, 0)),              # value.weight^T tile
        ],
        out_specs=(
            pl.BlockSpec((tS, H), lambda s, i: (s, 0)),              # out tile
            pl.BlockSpec((None, 1, H), lambda s, i: (s, 0, 0)),      # per-tile shift state
        ),
        scratch_shapes=[
            pltpu.VMEM((tS, H), w_dtype),                            # xk operand tile
            pltpu.VMEM((tS, H), jnp.float32),                        # f32 accumulator
        ],
        compiler_params=pltpu.CompilerParams(
            dimension_semantics=("parallel", "arbitrary"),
            vmem_limit_bytes=vmem_limit),
    )(x2, prevn, xk2, lnw2, lnb2, kwT, vwT)

    state_out = stout_all[nS - 1].reshape(1, 1, H)
    return out.reshape(1, S, H), state_out


def _reference(x, state, x_k, ln_w, ln_b, key_w, value_w):
    """Pure-JAX reference mirroring the PyTorch forward (batch=1, seq>1 path)."""
    last_x = x
    mean = jnp.mean(x, axis=-1, keepdims=True)
    var = jnp.mean((x - mean) ** 2, axis=-1, keepdims=True)
    xn = (x - mean) / jnp.sqrt(var + _LN_EPS) * ln_w + ln_b
    state_out = xn[:, -1:, :]
    past = jnp.concatenate([state.reshape(1, 1, -1), xn[:, :-1, :]], axis=1)
    sx = past - xn
    xk = xn + sx * x_k.reshape(1, 1, -1)
    k = jnp.maximum(xk @ key_w.T, 0.0) ** 2
    v = k @ value_w.T
    return v + last_x, state_out


if __name__ == "__main__":
    B, S, H, I = 1, 16, 32, 256  # batch, seq, hidden, intermediate (small test shapes)

    key = jax.random.PRNGKey(0)
    k0, k1, k2, k3, k4, k5, k6 = jax.random.split(key, 7)

    x = jax.random.normal(k0, (B, S, H), dtype=jnp.float32)
    state = jax.random.normal(k1, (1, 1, H), dtype=jnp.float32)

    # deterministic synthetic parameters (shapes match the PyTorch module)
    x_k = jax.random.uniform(k2, (1, 1, H), dtype=jnp.float32)
    key_w = jax.random.normal(k3, (I, H), dtype=jnp.float32) * 0.05    # key.weight   [I, H]
    value_w = jax.random.normal(k4, (H, I), dtype=jnp.float32) * 0.05  # value.weight [H, I]
    ln_w = 1.0 + 0.1 * jax.random.normal(k5, (H,), dtype=jnp.float32)  # ln2.weight
    ln_b = 0.1 * jax.random.normal(k6, (H,), dtype=jnp.float32)        # ln2.bias

    ref_out, ref_state = _reference(x, state, x_k, ln_w, ln_b, key_w, value_w)

    # 1) multi-tile grid (2 seq x 2 intermediate tiles), f32 weights: exercises the
    #    normalized halo + store/accumulate reduction with a tight tolerance.
    out, st = rwkv7_ffn_pallas(x, state, x_k, ln_w, ln_b, key_w, value_w,
                               ts=8, ti=128, weight_dtype=jnp.float32)
    jax.block_until_ready(out)
    jax.block_until_ready(st)
    np.testing.assert_allclose(np.asarray(out), np.asarray(ref_out), rtol=5e-3, atol=5e-3)
    np.testing.assert_allclose(np.asarray(st), np.asarray(ref_state), rtol=5e-3, atol=5e-3)

    # 2) auto-picked (generation-aware) tiles, f32 weights
    out2, st2 = rwkv7_ffn_pallas(x, state, x_k, ln_w, ln_b, key_w, value_w,
                                 weight_dtype=jnp.float32)
    jax.block_until_ready(out2)
    jax.block_until_ready(st2)
    np.testing.assert_allclose(np.asarray(out2), np.asarray(ref_out), rtol=5e-3, atol=5e-3)
    np.testing.assert_allclose(np.asarray(st2), np.asarray(ref_state), rtol=5e-3, atol=5e-3)

    # 3) production default path: bf16 weights (looser tolerance — relu^2 amplifies
    #    the bf16 cast; deliberate speed/accuracy tradeoff).
    out3, st3 = rwkv7_ffn_pallas(x, state, x_k, ln_w, ln_b, key_w, value_w, ts=8, ti=128)
    jax.block_until_ready(out3)
    jax.block_until_ready(st3)
    np.testing.assert_allclose(np.asarray(out3), np.asarray(ref_out), rtol=3e-2, atol=3e-2)
    np.testing.assert_allclose(np.asarray(st3), np.asarray(ref_state), rtol=3e-2, atol=3e-2)

    print("KERNEL_OK")
</pallas_src>

<mosaic_0001>
module attributes {stable_mosaic.version = 11 : i64} {
  func.func @_ffn_kernel(%arg0: i32, %arg1: i32, %arg2: memref<8x32xf32, #tpu.memory_space<vmem>>, %arg3: memref<1x1x32xf32, #tpu.memory_space<vmem>>, %arg4: memref<1x32xf32, #tpu.memory_space<vmem>>, %arg5: memref<1x32xf32, #tpu.memory_space<vmem>>, %arg6: memref<1x32xf32, #tpu.memory_space<vmem>>, %arg7: memref<32x128xf32, #tpu.memory_space<vmem>>, %arg8: memref<128x32xf32, #tpu.memory_space<vmem>>, %arg9: memref<8x32xf32, #tpu.memory_space<vmem>>, %arg10: memref<1x1x32xf32, #tpu.memory_space<vmem>>, %arg11: memref<8x32xf32, #tpu.memory_space<vmem>>, %arg12: memref<8x32xf32, #tpu.memory_space<vmem>>) attributes {dimension_semantics = [#tpu.dimension_semantics<parallel>, #tpu.dimension_semantics<arbitrary>], iteration_bounds = array<i64: 2, 2>, scalar_prefetch = 0 : i64, scratch_operands = 2 : i64, tpu.core_type = #tpu.core_type<tc>, window_params = [{transform_indices = @transform_0, window_bounds = array<i64: 8, 32>}, {transform_indices = @transform_1, window_bounds = array<i64: 1, 1, 32>}, {pipeline_mode = #tpu.pipeline_mode<synchronous>, transform_indices = @transform_2, window_bounds = array<i64: 1, 32>}, {pipeline_mode = #tpu.pipeline_mode<synchronous>, transform_indices = @transform_3, window_bounds = array<i64: 1, 32>}, {pipeline_mode = #tpu.pipeline_mode<synchronous>, transform_indices = @transform_4, window_bounds = array<i64: 1, 32>}, {transform_indices = @transform_5, window_bounds = array<i64: 32, 128>}, {transform_indices = @transform_6, window_bounds = array<i64: 128, 32>}, {transform_indices = @transform_7, window_bounds = array<i64: 8, 32>}, {transform_indices = @transform_8, window_bounds = array<i64: 1, 1, 32>}]} {
    %c0_i32 = arith.constant 0 : i32
    %0 = arith.cmpi eq, %arg1, %c0_i32 : i32
    %c1_i32 = arith.constant 1 : i32
    %1 = arith.cmpi eq, %arg1, %c1_i32 : i32
    %2 = arith.extui %0 : i1 to i32
    %c0_i32_0 = arith.constant 0 : i32
    %3 = arith.cmpi ne, %2, %c0_i32_0 : i32
    scf.if %3 {
      %c0_12 = arith.constant 0 : index
      %c0_13 = arith.constant 0 : index
      %19 = vector.load %arg2[%c0_12, %c0_13] : memref<8x32xf32, #tpu.memory_space<vmem>>, vector<8x32xf32>
      %c0_14 = arith.constant 0 : index
      %c0_15 = arith.constant 0 : index
      %20 = vector.load %arg5[%c0_14, %c0_15] : memref<1x32xf32, #tpu.memory_space<vmem>>, vector<1x32xf32>
      %c0_16 = arith.constant 0 : index
      %c0_17 = arith.constant 0 : index
      %21 = vector.load %arg6[%c0_16, %c0_17] : memref<1x32xf32, #tpu.memory_space<vmem>>, vector<1x32xf32>
      %cst_18 = arith.constant dense<0.000000e+00> : vector<8xf32>
      %22 = vector.multi_reduction <add>, %19, %cst_18 [1] : vector<8x32xf32> to vector<8xf32>
      %23 = vector.shape_cast %22 : vector<8xf32> to vector<8x1xf32>
      %cst_19 = arith.constant 3.200000e+01 : f32
      %24 = vector.broadcast %cst_19 : f32 to vector<8x1xf32>
      %25 = arith.divf %23, %24 : vector<8x1xf32>
      %26 = vector.broadcast %25 : vector<8x1xf32> to vector<8x32xf32>
      %27 = arith.subf %19, %26 : vector<8x32xf32>
      %28 = arith.mulf %27, %27 : vector<8x32xf32>
      %cst_20 = arith.constant dense<0.000000e+00> : vector<8xf32>
      %29 = vector.multi_reduction <add>, %28, %cst_20 [1] : vector<8x32xf32> to vector<8xf32>
      %30 = vector.shape_cast %29 : vector<8xf32> to vector<8x1xf32>
      %cst_21 = arith.constant 3.200000e+01 : f32
      %31 = vector.broadcast %cst_21 : f32 to vector<8x1xf32>
      %32 = arith.divf %30, %31 : vector<8x1xf32>
      %cst_22 = arith.constant 9.99999974E-6 : f32
      %33 = vector.broadcast %cst_22 : f32 to vector<8x1xf32>
      %34 = arith.addf %32, %33 : vector<8x1xf32>
      %35 = math.rsqrt %34 : vector<8x1xf32>
      %36 = vector.broadcast %35 : vector<8x1xf32> to vector<8x32xf32>
      %37 = arith.mulf %27, %36 : vector<8x32xf32>
      %38 = vector.broadcast %20 : vector<1x32xf32> to vector<8x32xf32>
      %39 = arith.mulf %37, %38 : vector<8x32xf32>
      %40 = vector.broadcast %21 : vector<1x32xf32> to vector<8x32xf32>
      %41 = arith.addf %39, %40 : vector<8x32xf32>
      %42 = vector.extract_strided_slice %41 {offsets = [7, 0], sizes = [1, 32], strides = [1, 1]} : vector<8x32xf32> to vector<1x32xf32>
      %c0_23 = arith.constant 0 : index
      %c0_24 = arith.constant 0 : index
      %c0_25 = arith.constant 0 : index
      %43 = vector.load %arg10[%c0_23, %c0_24, %c0_25] : memref<1x1x32xf32, #tpu.memory_space<vmem>>, vector<1x1x32xf32>
      %44 = vector.shape_cast %43 : vector<1x1x32xf32> to vector<1x32xf32>
      %45 = vector.shape_cast %42 : vector<1x32xf32> to vector<1x1x32xf32>
      tpu.vector_store %arg10[%c0_23, %c0_24, %c0_25], %45 {strides = array<i32>} : memref<1x1x32xf32, #tpu.memory_space<vmem>>, vector<1x1x32xf32>,
      %c0_26 = arith.constant 0 : index
      %c0_27 = arith.constant 0 : index
      %c0_28 = arith.constant 0 : index
      %46 = vector.load %arg3[%c0_26, %c0_27, %c0_28] : memref<1x1x32xf32, #tpu.memory_space<vmem>>, vector<1x1x32xf32>
      %47 = vector.shape_cast %46 : vector<1x1x32xf32> to vector<1x32xf32>
      %48 = vector.extract_strided_slice %41 {offsets = [0, 0], sizes = [7, 32], strides = [1, 1]} : vector<8x32xf32> to vector<7x32xf32>
      %49 = tpu.concatenate %47, %48 in 0 : vector<1x32xf32>, vector<7x32xf32> -> vector<8x32xf32>
      %c0_29 = arith.constant 0 : index
      %c0_30 = arith.constant 0 : index
      %50 = vector.load %arg4[%c0_29, %c0_30] : memref<1x32xf32, #tpu.memory_space<vmem>>, vector<1x32xf32>
      %51 = arith.subf %49, %41 : vector<8x32xf32>
      %52 = vector.broadcast %50 : vector<1x32xf32> to vector<8x32xf32>
      %53 = arith.mulf %51, %52 : vector<8x32xf32>
      %54 = arith.addf %41, %53 : vector<8x32xf32>
      %c0_31 = arith.constant 0 : index
      %c0_32 = arith.constant 0 : index
      %55 = vector.load %arg11[%c0_31, %c0_32] : memref<8x32xf32, #tpu.memory_space<vmem>>, vector<8x32xf32>
      tpu.vector_store %arg11[%c0_31, %c0_32], %54 {strides = array<i32>} : memref<8x32xf32, #tpu.memory_space<vmem>>, vector<8x32xf32>,
    } else {
    }
    %c0 = arith.constant 0 : index
    %c0_1 = arith.constant 0 : index
    %4 = vector.load %arg11[%c0, %c0_1] : memref<8x32xf32, #tpu.memory_space<vmem>>, vector<8x32xf32>
    %c0_2 = arith.constant 0 : index
    %c0_3 = arith.constant 0 : index
    %5 = vector.load %arg7[%c0_2, %c0_3] : memref<32x128xf32, #tpu.memory_space<vmem>>, vector<32x128xf32>
    %cst = arith.constant dense<0.000000e+00> : vector<8x128xf32>
    %6 = tpu.matmul %4, %5, %cst {dimension_numbers = #tpu.dot_dimension_numbers<[1], [0], [0], [1], [0, 0, 1, 1], [], []>} : vector<8x32xf32>, vector<32x128xf32>, vector<8x128xf32> -> vector<8x128xf32>
    %cst_4 = arith.constant 0.000000e+00 : f32
    %7 = vector.broadcast %cst_4 : f32 to vector<8x128xf32>
    %8 = arith.maximumf %6, %7 : vector<8x128xf32>
    %9 = arith.mulf %8, %8 : vector<8x128xf32>
    %c0_5 = arith.constant 0 : index
    %c0_6 = arith.constant 0 : index
    %10 = vector.load %arg8[%c0_5, %c0_6] : memref<128x32xf32, #tpu.memory_space<vmem>>, vector<128x32xf32>
    %cst_7 = arith.constant dense<0.000000e+00> : vector<8x32xf32>
    %11 = tpu.matmul %9, %10, %cst_7 {dimension_numbers = #tpu.dot_dimension_numbers<[1], [0], [0], [1], [0, 0, 1, 1], [], []>} : vector<8x128xf32>, vector<128x32xf32>, vector<8x32xf32> -> vector<8x32xf32>
    %12 = arith.extui %0 : i1 to i32
    %c0_i32_8 = arith.constant 0 : i32
    %13 = arith.cmpi ne, %12, %c0_i32_8 : i32
    scf.if %13 {
      %c0_12 = arith.constant 0 : index
      %c0_13 = arith.constant 0 : index
      %19 = vector.load %arg12[%c0_12, %c0_13] : memref<8x32xf32, #tpu.memory_space<vmem>>, vector<8x32xf32>
      tpu.vector_store %arg12[%c0_12, %c0_13], %11 {strides = array<i32>} : memref<8x32xf32, #tpu.memory_space<vmem>>, vector<8x32xf32>,
    } else {
    }
    %c0_i32_9 = arith.constant 0 : i32
    %14 = arith.cmpi ne, %arg1, %c0_i32_9 : i32
    %15 = arith.extui %14 : i1 to i32
    %c0_i32_10 = arith.constant 0 : i32
    %16 = arith.cmpi ne, %15, %c0_i32_10 : i32
    scf.if %16 {
      %c0_12 = arith.constant 0 : index
      %c0_13 = arith.constant 0 : index
      %19 = vector.load %arg12[%c0_12, %c0_13] : memref<8x32xf32, #tpu.memory_space<vmem>>, vector<8x32xf32>
      %20 = arith.addf %19, %11 : vector<8x32xf32>
      %c0_14 = arith.constant 0 : index
      %c0_15 = arith.constant 0 : index
      %21 = vector.load %arg12[%c0_14, %c0_15] : memref<8x32xf32, #tpu.memory_space<vmem>>, vector<8x32xf32>
      tpu.vector_store %arg12[%c0_14, %c0_15], %20 {strides = array<i32>} : memref<8x32xf32, #tpu.memory_space<vmem>>, vector<8x32xf32>,
    } else {
    }
    %17 = arith.extui %1 : i1 to i32
    %c0_i32_11 = arith.constant 0 : i32
    %18 = arith.cmpi ne, %17, %c0_i32_11 : i32
    scf.if %18 {
      %c0_12 = arith.constant 0 : index
      %c0_13 = arith.constant 0 : index
      %19 = vector.load %arg12[%c0_12, %c0_13] : memref<8x32xf32, #tpu.memory_space<vmem>>, vector<8x32xf32>
      %c0_14 = arith.constant 0 : index
      %c0_15 = arith.constant 0 : index
      %20 = vector.load %arg2[%c0_14, %c0_15] : memref<8x32xf32, #tpu.memory_space<vmem>>, vector<8x32xf32>
      %21 = arith.addf %19, %20 : vector<8x32xf32>
      %c0_16 = arith.constant 0 : index
      %c0_17 = arith.constant 0 : index
      %22 = vector.load %arg9[%c0_16, %c0_17] : memref<8x32xf32, #tpu.memory_space<vmem>>, vector<8x32xf32>
      tpu.vector_store %arg9[%c0_16, %c0_17], %21 {strides = array<i32>} : memref<8x32xf32, #tpu.memory_space<vmem>>, vector<8x32xf32>,
    } else {
    }
    return
  }
  func.func @transform_0(%arg0: i32, %arg1: i32) -> (i32, i32) {
    %c0_i32 = arith.constant 0 : i32
    %c0_i32_0 = arith.constant 0 : i32
    return %arg0, %c0_i32 : i32, i32
  }
  func.func @transform_1(%arg0: i32, %arg1: i32) -> (i32, i32, i32) {
    %c0_i32 = arith.constant 0 : i32
    %c0_i32_0 = arith.constant 0 : i32
    %c0_i32_1 = arith.constant 0 : i32
    return %arg0, %c0_i32, %c0_i32_0 : i32, i32, i32
  }
  func.func @transform_2(%arg0: i32, %arg1: i32) -> (i32, i32) {
    %c0_i32 = arith.constant 0 : i32
    %c0_i32_0 = arith.constant 0 : i32
    %c0_i32_1 = arith.constant 0 : i32
    return %c0_i32, %c0_i32_0 : i32, i32
  }
  func.func @transform_3(%arg0: i32, %arg1: i32) -> (i32, i32) {
    %c0_i32 = arith.constant 0 : i32
    %c0_i32_0 = arith.constant 0 : i32
    %c0_i32_1 = arith.constant 0 : i32
    return %c0_i32, %c0_i32_0 : i32, i32
  }
  func.func @transform_4(%arg0: i32, %arg1: i32) -> (i32, i32) {
    %c0_i32 = arith.constant 0 : i32
    %c0_i32_0 = arith.constant 0 : i32
    %c0_i32_1 = arith.constant 0 : i32
    return %c0_i32, %c0_i32_0 : i32, i32
  }
  func.func @transform_5(%arg0: i32, %arg1: i32) -> (i32, i32) {
    %c0_i32 = arith.constant 0 : i32
    %c0_i32_0 = arith.constant 0 : i32
    return %c0_i32, %arg1 : i32, i32
  }
  func.func @transform_6(%arg0: i32, %arg1: i32) -> (i32, i32) {
    %c0_i32 = arith.constant 0 : i32
    %c0_i32_0 = arith.constant 0 : i32
    return %arg1, %c0_i32 : i32, i32
  }
  func.func @transform_7(%arg0: i32, %arg1: i32) -> (i32, i32) {
    %c0_i32 = arith.constant 0 : i32
    %c0_i32_0 = arith.constant 0 : i32
    return %arg0, %c0_i32 : i32, i32
  }
  func.func @transform_8(%arg0: i32, %arg1: i32) -> (i32, i32, i32) {
    %c0_i32 = arith.constant 0 : i32
    %c0_i32_0 = arith.constant 0 : i32
    %c0_i32_1 = arith.constant 0 : i32
    return %arg0, %c0_i32, %c0_i32_0 : i32, i32, i32
  }
}

</mosaic_0001>

<llo_original>
// kernel: tpu_custom_call.1
$region0: #{tpu_custom_call.1}
  #allocation0 [shape = 'u32[]', space=smem, size = 0x4, offset = 0x4, fixed_abs, tag = 'smem constant byte address 0x4 - core index']
  #allocation1 [shape = 'u32[144,128]{1,0:T(1,128)}', space=vmem, size = 0x12000, scoped, tag = 'internal scratch']
  #allocation2 [shape = 'f32[8,32]{1,0:T(8,128)}', space=vmem, size = 0x1000, scoped, tag = 'scratch operand']
  #allocation3 [shape = 'f32[8,32]{1,0:T(8,128)}', space=vmem, size = 0x1000, scoped, tag = 'scratch operand']
  %s0 = inlined_call_operand.hbm [shape: f32[16,32], index: 0, kind: input, shape index: {}]
  %s1 = inlined_call_operand.hbm [shape: f32[2,1,32], index: 1, kind: input, shape index: {}]
  %s2 = inlined_call_operand.hbm [shape: f32[1,32], index: 2, kind: input, shape index: {}]
  %s3 = inlined_call_operand.hbm [shape: f32[1,32], index: 3, kind: input, shape index: {}]
  %s4 = inlined_call_operand.hbm [shape: f32[1,32], index: 4, kind: input, shape index: {}]
  %s5 = inlined_call_operand.hbm [shape: f32[32,256], index: 5, kind: input, shape index: {}]
  %s6 = inlined_call_operand.hbm [shape: f32[256,32], index: 6, kind: input, shape index: {}]
  %s7 = inlined_call_operand.hbm [shape: f32[16,32], index: 7, kind: output, shape index: {0}]
  %s8 = inlined_call_operand.hbm [shape: f32[2,1,32], index: 8, kind: output, shape index: {1}]
  %9 = xla_tuple %s7, %s8
  %s10 = sld [smem:[#allocation0]]
  $region113: #{tpu_custom_call.1} parent=0
    _
  %s12 = ssub.s32 1, %s10
  %s13 = scalar_select 0, %s12, %s10
  $region1: #{tpu_custom_call.1} parent=0
    #allocation4 [shape = 'u8[8192]{0}', space=vmem, size = 0x2000, scoped, tag = 'input window, operand 0']
    #allocation5 [shape = 's32[2]{0}', space=sflag, size = 0x8, scoped, tag = 'scoped memory for tpu_custom_call.1']
    #allocation6 [shape = 's32[2]{0}', space=sflag, size = 0x8, scoped, tag = 'scoped memory for tpu_custom_call.1']
    #allocation7 [shape = 'u8[1024]{0}', space=vmem, size = 0x400, scoped, tag = 'input window, operand 1']
    #allocation8 [shape = 's32[2]{0}', space=sflag, size = 0x8, scoped, tag = 'scoped memory for tpu_custom_call.1']
    #allocation9 [shape = 'u8[512]{0}', space=vmem, size = 0x400, scoped, tag = 'input window, operand 2, single buffered']
    #allocation10 [shape = 'u8[512]{0}', space=vmem, size = 0x400, scoped, tag = 'input window, operand 3, single buffered']
    #allocation11 [shape = 's32[1]{0}', space=sflag, size = 0x4, scoped, tag = 'scoped memory for tpu_custom_call.1']
    #allocation12 [shape = 'u8[512]{0}', space=vmem, size = 0x400, scoped, tag = 'input window, operand 4, single buffered']
    #allocation13 [shape = 'u8[32768]{0}', space=vmem, size = 0x8000, scoped, tag = 'input window, operand 5']
    #allocation14 [shape = 's32[2]{0}', space=sflag, size = 0x8, scoped, tag = 'scoped memory for tpu_custom_call.1']
    #allocation15 [shape = 'u8[131072]{0}', space=vmem, size = 0x20000, scoped, tag = 'input window, operand 6']
    #allocation16 [shape = 'u8[8192]{0}', space=vmem, size = 0x2000, scoped, tag = 'output window, operand 0']
    #allocation17 [shape = 'u8[1024]{0}', space=vmem, size = 0x400, scoped, tag = 'output window, operand 1']
    #allocation18 [shape = 's32[2]{0}', space=sflag, size = 0x8, scoped, tag = 'scoped memory for tpu_custom_call.1']
    %14 = vsyncpa [#allocation5], 0
    %s15 = scalar_lea.sflag [#allocation5], 1
    %16 = vsyncpa %s15, 0
    %17 = vsyncpa [#allocation8], 0
    %s18 = scalar_lea.sflag [#allocation8], 1
    %19 = vsyncpa %s18, 0
    %20 = vsyncpa [#allocation11], 0
    %21 = vsyncpa [#allocation14], 0
    %s22 = scalar_lea.sflag [#allocation14], 1
    %23 = vsyncpa %s22, 0
    %24 = vsyncpa [#allocation6], 0
    %s25 = scalar_lea.sflag [#allocation6], 1
    %26 = vsyncpa %s25, 0
    %27 = vsyncpa [#allocation18], 0
    %s28 = scalar_lea.sflag [#allocation18], 1
    %29 = vsyncpa %s28, 0
    loop: start=0, step=1, limit=6
    $region2: #{tpu_custom_call.1} parent=1 // loop_pre_header
      _
    $region3: #{tpu_custom_call.1} parent=1 // loop_header
      %s31 = sphi 0, %s35
      %p32 = scmp.ge.s32.totalorder %s31, 6
      %s38 = sphi 0, %s50
      %s39 = sphi 0, %s46
      %s40 = sphi 0, %s38
      %s41 = sphi 0, %s39
      %s42 = sphi 0, %s40
      %s43 = sphi 0, %s41
      %s53 = sphi 0, %s55
      %s56 = sphi 0, %s53
      %s57 = sphi 0, %s56
      %s73 = sphi 0, %s57
      %s79 = sphi 0, %s81
      %s82 = sphi 0, %s79
      %s83 = sphi 0, %s82
      %s99 = sphi 0, %s83
      %s103 = sphi 0, %s103
      %s105 = sphi 0, %s103
      %s106 = sphi 0, %s105
      %s120 = sphi 0, %s106
      %s124 = sphi 0, %s124
      %s126 = sphi 0, %s124
      %s127 = sphi 0, %s126
      %s141 = sphi 0, %s127
      %s145 = sphi 0, %s145
      %s147 = sphi 0, %s145
      %s148 = sphi 0, %s147
      %s162 = sphi 0, %s148
      %s168 = sphi 0, %s170
      %s171 = sphi 0, %s168
      %s172 = sphi 0, %s171
      %s188 = sphi 0, %s172
      %s194 = sphi 0, %s196
      %s197 = sphi 0, %s194
      %s198 = sphi 0, %s197
      %s214 = sphi 0, %s198
      %s220 = sphi 0, %s222
      %s223 = sphi 0, %s220
      %s224 = sphi 0, %s223
      %s240 = sphi 0, %s224
      %s246 = sphi 0, %s248
      %s249 = sphi 0, %s246
      %s250 = sphi 0, %s249
      %s266 = sphi 0, %s250
    $region4: #{tpu_custom_call.1} parent=1 // loop_header_branch
      %34 = sbr.rel (%p32) target = $region8
    $region5: #{tpu_custom_call.1} parent=1 // loop_body
      %s36 = ssub.s32 %s31, 1
      %s37 = ssub.s32 %s31, 2
      %s44 = sadd.s32 1, %s39
      %p45 = scmp.ge.s32.totalorder %s44, 2
      %s46 = scalar_select %p45, 0, %s44
      %s47 = sadd.s32 1, %s38
      %s48 = scalar_select %p45, %s47, %s38
      %p49 = scmp.ge.s32.totalorder %s48, 2
      %s50 = scalar_select %p49, 0, %s48
      %s51 = ssub.s32 %s38, %s50
      %p52 = scmp.eq.s32.totalorder %s51, 0
      %s54 = sadd.s32 %s53, 1
      %s55 = scalar_select %p52, %s53, %s54
      %p58 = pneg %p52
      %p59 = scmp.eq.s32.totalorder %s31, 3
      %p60 = por %p58, %p59
      %p61 = scmp.ne.s32.totalorder %s53, %s56
      %p62 = scmp.eq.s32.totalorder %s31, 0
      %p63 = por %p61, %p62
      %p64 = scmp.ne.s32.totalorder %s53, %s56
      %p65 = scmp.eq.s32.totalorder %s36, 3
      %p66 = por %p64, %p65
      %p67 = scmp.ne.s32.totalorder %s56, %s57
      %p68 = scmp.eq.s32.totalorder %s36, 0
      %p69 = por %p67, %p68
      %p70 = scmp.ne.s32.totalorder %s56, %s57
      %p71 = scmp.eq.s32.totalorder %s37, 3
      %p72 = por %p70, %p71
      %p74 = scmp.ne.s32.totalorder %s57, %s73
      %p75 = scmp.eq.s32.totalorder %s37, 0
      %p76 = por %p74, %p75
      %s77 = ssub.s32 %s38, %s50
      %p78 = scmp.eq.s32.totalorder %s77, 0
      %s80 = sadd.s32 %s79, 1
      %s81 = scalar_select %p78, %s79, %s80
      %p84 = pneg %p78
      %p85 = scmp.eq.s32.totalorder %s31, 3
      %p86 = por %p84, %p85
      %p87 = scmp.ne.s32.totalorder %s79, %s82
      %p88 = scmp.eq.s32.totalorder %s31, 0
      %p89 = por %p87, %p88
      %p90 = scmp.ne.s32.totalorder %s79, %s82
      %p91 = scmp.eq.s32.totalorder %s36, 3
      %p92 = por %p90, %p91
      %p93 = scmp.ne.s32.totalorder %s82, %s83
      %p94 = scmp.eq.s32.totalorder %s36, 0
      %p95 = por %p93, %p94
      %p96 = scmp.ne.s32.totalorder %s82, %s83
      %p97 = scmp.eq.s32.totalorder %s37, 3
      %p98 = por %p96, %p97
      %p100 = scmp.ne.s32.totalorder %s83, %s99
      %p101 = scmp.eq.s32.totalorder %s37, 0
      %p102 = por %p100, %p101
      %s104 = sadd.s32 %s103, 1
      %p107 = scmp.eq.s32.totalorder %s31, 3
      %p108 = scmp.ne.s32.totalorder %s103, %s105
      %p109 = scmp.eq.s32.totalorder %s31, 0
      %p110 = por %p108, %p109
      %p111 = scmp.ne.s32.totalorder %s103, %s105
      %p112 = scmp.eq.s32.totalorder %s36, 3
      %p113 = por %p111, %p112
      %p114 = scmp.ne.s32.totalorder %s105, %s106
      %p115 = scmp.eq.s32.totalorder %s36, 0
      %p116 = por %p114, %p115
      %p117 = scmp.ne.s32.totalorder %s105, %s106
      %p118 = scmp.eq.s32.totalorder %s37, 3
      %p119 = por %p117, %p118
      %p121 = scmp.ne.s32.totalorder %s106, %s120
      %p122 = scmp.eq.s32.totalorder %s37, 0
      %p123 = por %p121, %p122
      %s125 = sadd.s32 %s124, 1
      %p128 = scmp.eq.s32.totalorder %s31, 3
      %p129 = scmp.ne.s32.totalorder %s124, %s126
      %p130 = scmp.eq.s32.totalorder %s31, 0
      %p131 = por %p129, %p130
      %p132 = scmp.ne.s32.totalorder %s124, %s126
      %p133 = scmp.eq.s32.totalorder %s36, 3
      %p134 = por %p132, %p133
      %p135 = scmp.ne.s32.totalorder %s126, %s127
      %p136 = scmp.eq.s32.totalorder %s36, 0
      %p137 = por %p135, %p136
      %p138 = scmp.ne.s32.totalorder %s126, %s127
      %p139 = scmp.eq.s32.totalorder %s37, 3
      %p140 = por %p138, %p139
      %p142 = scmp.ne.s32.totalorder %s127, %s141
      %p143 = scmp.eq.s32.totalorder %s37, 0
      %p144 = por %p142, %p143
      %s146 = sadd.s32 %s145, 1
      %p149 = scmp.eq.s32.totalorder %s31, 3
      %p150 = scmp.ne.s32.totalorder %s145, %s147
      %p151 = scmp.eq.s32.totalorder %s31, 0
      %p152 = por %p150, %p151
      %p153 = scmp.ne.s32.totalorder %s145, %s147
      %p154 = scmp.eq.s32.totalorder %s36, 3
      %p155 = por %p153, %p154
      %p156 = scmp.ne.s32.totalorder %s147, %s148
      %p157 = scmp.eq.s32.totalorder %s36, 0
      %p158 = por %p156, %p157
      %p159 = scmp.ne.s32.totalorder %s147, %s148
      %p160 = scmp.eq.s32.totalorder %s37, 3
      %p161 = por %p159, %p160
      %p163 = scmp.ne.s32.totalorder %s148, %s162
      %p164 = scmp.eq.s32.totalorder %s37, 0
      %p165 = por %p163, %p164
      %s166 = ssub.s32 %s39, %s46
      %p167 = scmp.eq.s32.totalorder %s166, 0
      %s169 = sadd.s32 %s168, 1
      %s170 = scalar_select %p167, %s168, %s169
      %p173 = pneg %p167
      %p174 = scmp.eq.s32.totalorder %s31, 3
      %p175 = por %p173, %p174
      %p176 = scmp.ne.s32.totalorder %s168, %s171
      %p177 = scmp.eq.s32.totalorder %s31, 0
      %p178 = por %p176, %p177
      %p179 = scmp.ne.s32.totalorder %s168, %s171
      %p180 = scmp.eq.s32.totalorder %s36, 3
      %p181 = por %p179, %p180
      %p182 = scmp.ne.s32.totalorder %s171, %s172
      %p183 = scmp.eq.s32.totalorder %s36, 0
      %p184 = por %p182, %p183
      %p185 = scmp.ne.s32.totalorder %s171, %s172
      %p186 = scmp.eq.s32.totalorder %s37, 3
      %p187 = por %p185, %p186
      %p189 = scmp.ne.s32.totalorder %s172, %s188
      %p190 = scmp.eq.s32.totalorder %s37, 0
      %p191 = por %p189, %p190
      %s192 = ssub.s32 %s39, %s46
      %p193 = scmp.eq.s32.totalorder %s192, 0
      %s195 = sadd.s32 %s194, 1
      %s196 = scalar_select %p193, %s194, %s195
      %p199 = pneg %p193
      %p200 = scmp.eq.s32.totalorder %s31, 3
      %p201 = por %p199, %p200
      %p202 = scmp.ne.s32.totalorder %s194, %s197
      %p203 = scmp.eq.s32.totalorder %s31, 0
      %p204 = por %p202, %p203
      %p205 = scmp.ne.s32.totalorder %s194, %s197
      %p206 = scmp.eq.s32.totalorder %s36, 3
      %p207 = por %p205, %p206
      %p208 = scmp.ne.s32.totalorder %s197, %s198
      %p209 = scmp.eq.s32.totalorder %s36, 0
      %p210 = por %p208, %p209
      %p211 = scmp.ne.s32.totalorder %s197, %s198
      %p212 = scmp.eq.s32.totalorder %s37, 3
      %p213 = por %p211, %p212
      %p215 = scmp.ne.s32.totalorder %s198, %s214
      %p216 = scmp.eq.s32.totalorder %s37, 0
      %p217 = por %p215, %p216
      %s218 = ssub.s32 %s38, %s50
      %p219 = scmp.eq.s32.totalorder %s218, 0
      %s221 = sadd.s32 %s220, 1
      %s222 = scalar_select %p219, %s220, %s221
      %p225 = pneg %p219
      %p226 = scmp.eq.s32.totalorder %s31, 3
      %p227 = por %p225, %p226
      %p228 = scmp.ne.s32.totalorder %s220, %s223
      %p229 = scmp.eq.s32.totalorder %s31, 0
      %p230 = por %p228, %p229
      %p231 = scmp.ne.s32.totalorder %s220, %s223
      %p232 = scmp.eq.s32.totalorder %s36, 3
      %p233 = por %p231, %p232
      %p234 = scmp.ne.s32.totalorder %s223, %s224
      %p235 = scmp.eq.s32.totalorder %s36, 0
      %p236 = por %p234, %p235
      %p237 = scmp.ne.s32.totalorder %s223, %s224
      %p238 = scmp.eq.s32.totalorder %s37, 3
      %p239 = por %p237, %p238
      %p241 = scmp.ne.s32.totalorder %s224, %s240
      %p242 = scmp.eq.s32.totalorder %s37, 0
      %p243 = por %p241, %p242
      %s244 = ssub.s32 %s38, %s50
      %p245 = scmp.eq.s32.totalorder %s244, 0
      %s247 = sadd.s32 %s246, 1
      %s248 = scalar_select %p245, %s246, %s247
      %p251 = pneg %p245
      %p252 = scmp.eq.s32.totalorder %s31, 3
      %p253 = por %p251, %p252
      %p254 = scmp.ne.s32.totalorder %s246, %s249
      %p255 = scmp.eq.s32.totalorder %s31, 0
      %p256 = por %p254, %p255
      %p257 = scmp.ne.s32.totalorder %s246, %s249
      %p258 = scmp.eq.s32.totalorder %s36, 3
      %p259 = por %p257, %p258
      %p260 = scmp.ne.s32.totalorder %s249, %s250
      %p261 = scmp.eq.s32.totalorder %s36, 0
      %p262 = por %p260, %p261
      %p263 = scmp.ne.s32.totalorder %s249, %s250
      %p264 = scmp.eq.s32.totalorder %s37, 3
      %p265 = por %p263, %p264
      %p267 = scmp.ne.s32.totalorder %s250, %s266
      %p268 = scmp.eq.s32.totalorder %s37, 0
      %p269 = por %p267, %p268
      %p270 = scmp.le.s32.totalorder 1, %s31
      %p271 = scmp.lt.s32.totalorder %s31, 5
      %p272 = pnand %p270, %p271
      %p273 = pneg %p272
      // Predicated region
      $region9: #{tpu_custom_call.1} parent=5 // pred_check
        _
      $region10: #{tpu_custom_call.1} parent=5 // pred_check_branch
        %275 = sbr.rel (%p272) target = $region12
      $region11: #{tpu_custom_call.1} parent=5 // pred_region
        %s276 = ssub.s32 %s31, 1
        // Predicated region
        $region13: #{tpu_custom_call.1} parent=11 // pred_check
          %p277 = pneg %p116
        $region14: #{tpu_custom_call.1} parent=11 // pred_check_branch
          %279 = sbr.rel (%p277) target = $region16
        $region15: #{tpu_custom_call.1} parent=11 // pred_region
          %s281 = ssub.s32 16, 16
          %282 = vsyncadd [#allocation8], %s281
          %s284 = sshll.u32 [#allocation9], 4
          %s285 = int_to_ptr.vmem [resolvable:$true] %s284
          %287 = dma.hbm_to_vmem [thread:$0]  %s2, 16, %s285, [#allocation8]
        $region16: #{tpu_custom_call.1} parent=11 // pred_fallthru
          _
        // Predicated region
        $region17: #{tpu_custom_call.1} parent=11 // pred_check
          %p288 = pneg %p137
        $region18: #{tpu_custom_call.1} parent=11 // pred_check_branch
          %290 = sbr.rel (%p288) target = $region20
        $region19: #{tpu_custom_call.1} parent=11 // pred_region
          %s292 = ssub.s32 16, 16
          %293 = vsyncadd [#allocation11], %s292
          %s295 = sshll.u32 [#allocation10], 4
          %s296 = int_to_ptr.vmem [resolvable:$true] %s295
          %298 = dma.hbm_to_vmem [thread:$0]  %s3, 16, %s296, [#allocation11]
        $region20: #{tpu_custom_call.1} parent=11 // pred_fallthru
          _
        // Predicated region
        $region21: #{tpu_custom_call.1} parent=11 // pred_check
          %p299 = pneg %p158
        $region22: #{tpu_custom_call.1} parent=11 // pred_check_branch
          %301 = sbr.rel (%p299) target = $region24
        $region23: #{tpu_custom_call.1} parent=11 // pred_region
          %s303 = ssub.s32 16, 16
          %304 = vsyncadd [#allocation11], %s303
          %s306 = sshll.u32 [#allocation12], 4
          %s307 = int_to_ptr.vmem [resolvable:$true] %s306
          %309 = dma.hbm_to_vmem [thread:$0]  %s4, 16, %s307, [#allocation11]
        $region24: #{tpu_custom_call.1} parent=11 // pred_fallthru
          _
      $region12: #{tpu_custom_call.1} parent=5 // pred_fallthru
        _
      %p310 = scmp.lt.s32.totalorder %s31, 4
      // Predicated region
      $region25: #{tpu_custom_call.1} parent=5 // pred_check
        %p311 = pneg %p310
      $region26: #{tpu_custom_call.1} parent=5 // pred_check_branch
        %313 = sbr.rel (%p311) target = $region28
      $region27: #{tpu_custom_call.1} parent=5 // pred_region
        // Predicated region
        $region29: #{tpu_custom_call.1} parent=27 // pred_check
          %p314 = pneg %p63
        $region30: #{tpu_custom_call.1} parent=27 // pred_check_branch
          %316 = sbr.rel (%p314) target = $region32
        $region31: #{tpu_custom_call.1} parent=27 // pred_region
          %s317 = sand.u32 %s53, 1
          %s318 = scalar_lea.sflag [#allocation5], %s317
          %s319 = sand.u32 %s53, 1
          %s320 = smul.addr %s319, 8
          %s321 = scalar_lea.vmem [#allocation4], %s320
          %s323 = ssub.s32 128, 128
          %324 = vsyncadd %s318, %s323
          %s325 = smul.addr %s38, 128
          %s326 = scalar_lea.hbm %s0, %s325
          %s328 = sshll.u32 %s321, 4
          %s329 = int_to_ptr.vmem [resolvable:$true] %s328
          %331 = dma.hbm_to_vmem [thread:$0]  %s326, 128, %s329, %s318
        $region32: #{tpu_custom_call.1} parent=27 // pred_fallthru
          _
        // Predicated region
        $region33: #{tpu_custom_call.1} parent=27 // pred_check
          %p332 = pneg %p89
        $region34: #{tpu_custom_call.1} parent=27 // pred_check_branch
          %334 = sbr.rel (%p332) target = $region36
        $region35: #{tpu_custom_call.1} parent=27 // pred_region
          %s335 = sand.u32 %s31, 1
          %s336 = scalar_lea.sflag [#allocation8], %s335
          %s337 = sand.u32 %s79, 1
          %s338 = scalar_lea.vmem [#allocation7], %s337
          %s340 = ssub.s32 16, 16
          %341 = vsyncadd %s336, %s340
          %s342 = smul.addr %s38, 16
          %s343 = scalar_lea.hbm %s1, %s342
          %s345 = sshll.u32 %s338, 4
          %s346 = int_to_ptr.vmem [resolvable:$true] %s345
          %348 = dma.hbm_to_vmem [thread:$0]  %s343, 16, %s346, %s336
        $region36: #{tpu_custom_call.1} parent=27 // pred_fallthru
          _
        // Predicated region
        $region37: #{tpu_custom_call.1} parent=27 // pred_check
          %p349 = pneg %p178
        $region38: #{tpu_custom_call.1} parent=27 // pred_check_branch
          %351 = sbr.rel (%p349) target = $region40
        $region39: #{tpu_custom_call.1} parent=27 // pred_region
          %s352 = sand.u32 %s31, 1
          %s353 = scalar_lea.sflag [#allocation14], %s352
          %s354 = sand.u32 %s168, 1
          %s355 = smul.addr %s354, 32
          %s356 = scalar_lea.vmem [#allocation13], %s355
          %s358 = ssub.s32 512, 512
          %359 = vsyncadd %s353, %s358
          %s360 = smul.addr %s39, 128
          %s361 = scalar_lea.hbm %s5, %s360
          %s362 = sshll.u32 %s356, 4
          %s363 = int_to_ptr.vmem [resolvable:$true] %s362
          %368 = dma.hbm_to_vmem [thread:$0]  %s361, 512, %s363, %s353, 256, 128, 8
        $region40: #{tpu_custom_call.1} parent=27 // pred_fallthru
          _
        // Predicated region
        $region41: #{tpu_custom_call.1} parent=27 // pred_check
          %p369 = pneg %p204
        $region42: #{tpu_custom_call.1} parent=27 // pred_check_branch
          %371 = sbr.rel (%p369) target = $region44
        $region43: #{tpu_custom_call.1} parent=27 // pred_region
          %s372 = sand.u32 %s31, 1
          %s373 = scalar_lea.sflag [#allocation14], %s372
          %s374 = sand.u32 %s194, 1
          %s375 = smul.addr %s374, 128
          %s376 = scalar_lea.vmem [#allocation15], %s375
          %s377 = smul.u32 16, %s39
          %s379 = ssub.s32 2048, 2048
          %380 = vsyncadd %s373, %s379
          %s381 = smul.addr %s377, 128
          %s382 = scalar_lea.hbm %s6, %s381
          %s383 = sshll.u32 %s376, 4
          %s384 = int_to_ptr.vmem [resolvable:$true] %s383
          %389 = dma.hbm_to_vmem [thread:$0]  %s382, 2048, %s384, %s373, 128, 128, 8
        $region44: #{tpu_custom_call.1} parent=27 // pred_fallthru
          _
      $region28: #{tpu_custom_call.1} parent=5 // pred_fallthru
        _
      %p390 = scmp.le.s32.totalorder 1, %s31
      %p391 = scmp.lt.s32.totalorder %s31, 5
      %p392 = pnand %p390, %p391
      %p393 = pneg %p392
      // Predicated region
      $region45: #{tpu_custom_call.1} parent=5 // pred_check
        _
      $region46: #{tpu_custom_call.1} parent=5 // pred_check_branch
        %395 = sbr.rel (%p392) target = $region48
      $region47: #{tpu_custom_call.1} parent=5 // pred_region
        %s396 = ssub.s32 %s31, 1
        %s397 = sand.u32 %s56, 1
        %s398 = scalar_lea.sflag [#allocation5], %s397
        %s399 = sand.u32 %s56, 1
        %s400 = smul.addr %s399, 8
        %s401 = scalar_lea.vmem [#allocation4], %s400
        // Predicated region
        $region49: #{tpu_custom_call.1} parent=47 // pred_check
          %p402 = pneg %p69
        $region50: #{tpu_custom_call.1} parent=47 // pred_check_branch
          %404 = sbr.rel (%p402) target = $region52
        $region51: #{tpu_custom_call.1} parent=47 // pred_region
          %405 = dma.done %s398, 128
        $region52: #{tpu_custom_call.1} parent=47 // pred_fallthru
          _
        %s406 = sand.u32 %s36, 1
        %s407 = scalar_lea.sflag [#allocation8], %s406
        %s408 = sand.u32 %s82, 1
        %s409 = scalar_lea.vmem [#allocation7], %s408
        // Predicated region
        $region53: #{tpu_custom_call.1} parent=47 // pred_check
          %p410 = pneg %p95
        $region54: #{tpu_custom_call.1} parent=47 // pred_check_branch
          %412 = sbr.rel (%p410) target = $region56
        $region55: #{tpu_custom_call.1} parent=47 // pred_region
          %413 = dma.done %s407, 16
        $region56: #{tpu_custom_call.1} parent=47 // pred_fallthru
          _
        // Predicated region
        $region57: #{tpu_custom_call.1} parent=47 // pred_check
          %p414 = pneg %p116
        $region58: #{tpu_custom_call.1} parent=47 // pred_check_branch
          %416 = sbr.rel (%p414) target = $region60
        $region59: #{tpu_custom_call.1} parent=47 // pred_region
          %417 = dma.done [#allocation8], 16
        $region60: #{tpu_custom_call.1} parent=47 // pred_fallthru
          _
        // Predicated region
        $region61: #{tpu_custom_call.1} parent=47 // pred_check
          %p418 = pneg %p137
        $region62: #{tpu_custom_call.1} parent=47 // pred_check_branch
          %420 = sbr.rel (%p418) target = $region64
        $region63: #{tpu_custom_call.1} parent=47 // pred_region
          %421 = dma.done [#allocation11], 16
        $region64: #{tpu_custom_call.1} parent=47 // pred_fallthru
          _
        // Predicated region
        $region65: #{tpu_custom_call.1} parent=47 // pred_check
          %p422 = pneg %p158
        $region66: #{tpu_custom_call.1} parent=47 // pred_check_branch
          %424 = sbr.rel (%p422) target = $region68
        $region67: #{tpu_custom_call.1} parent=47 // pred_region
          %425 = dma.done [#allocation11], 16
        $region68: #{tpu_custom_call.1} parent=47 // pred_fallthru
          _
        %s426 = sand.u32 %s36, 1
        %s427 = scalar_lea.sflag [#allocation14], %s426
        %s428 = sand.u32 %s171, 1
        %s429 = smul.addr %s428, 32
        %s430 = scalar_lea.vmem [#allocation13], %s429
        // Predicated region
        $region69: #{tpu_custom_call.1} parent=47 // pred_check
          %p431 = pneg %p184
        $region70: #{tpu_custom_call.1} parent=47 // pred_check_branch
          %433 = sbr.rel (%p431) target = $region72
        $region71: #{tpu_custom_call.1} parent=47 // pred_region
          %434 = dma.done %s427, 512
        $region72: #{tpu_custom_call.1} parent=47 // pred_fallthru
          _
        %s435 = sand.u32 %s36, 1
        %s436 = scalar_lea.sflag [#allocation14], %s435
        %s437 = sand.u32 %s197, 1
        %s438 = smul.addr %s437, 128
        %s439 = scalar_lea.vmem [#allocation15], %s438
        // Predicated region
        $region73: #{tpu_custom_call.1} parent=47 // pred_check
          %p440 = pneg %p210
        $region74: #{tpu_custom_call.1} parent=47 // pred_check_branch
          %442 = sbr.rel (%p440) target = $region76
        $region75: #{tpu_custom_call.1} parent=47 // pred_region
          %443 = dma.done %s436, 2048
        $region76: #{tpu_custom_call.1} parent=47 // pred_fallthru
          _
        %s444 = sand.u32 %s56, 1
        %s445 = scalar_lea.sflag [#allocation5], %s444
        %s446 = sand.u32 %s56, 1
        %s447 = smul.addr %s446, 8
        %s448 = scalar_lea.vmem [#allocation4], %s447
        %p449 = pneg %p69
        %p450 = pneg %p66
        %s451 = sand.u32 %s36, 1
        %s452 = scalar_lea.sflag [#allocation8], %s451
        %s453 = sand.u32 %s82, 1
        %s454 = scalar_lea.vmem [#allocation7], %s453
        %p455 = pneg %p95
        %p456 = pneg %p92
        %p457 = pneg %p116
        %p458 = pneg %p113
        %p459 = pneg %p137
        %p460 = pneg %p134
        %p461 = pneg %p158
        %p462 = pneg %p155
        %s463 = sand.u32 %s36, 1
        %s464 = scalar_lea.sflag [#allocation14], %s463
        %s465 = sand.u32 %s171, 1
        %s466 = smul.addr %s465, 32
        %s467 = scalar_lea.vmem [#allocation13], %s466
        %p468 = pneg %p184
        %p469 = pneg %p181
        %s470 = sand.u32 %s36, 1
        %s471 = scalar_lea.sflag [#allocation14], %s470
        %s472 = sand.u32 %s197, 1
        %s473 = smul.addr %s472, 128
        %s474 = scalar_lea.vmem [#allocation15], %s473
        %p475 = pneg %p210
        %p476 = pneg %p207
        %p477 = pneg %p236
        %p478 = pneg %p233
        %s479 = sand.u32 %s223, 1
        %s480 = scalar_lea.sflag [#allocation6], %s479
        %s481 = sand.u32 %s223, 1
        %s482 = smul.addr %s481, 8
        %s483 = scalar_lea.vmem [#allocation16], %s482
        %p484 = pneg %p262
        %p485 = pneg %p259
        %s486 = sand.u32 %s249, 1
        %s487 = scalar_lea.sflag [#allocation18], %s486
        %s488 = sand.u32 %s249, 1
        %s489 = scalar_lea.vmem [#allocation17], %s488
        %s490 = smul.u32 16, %s41
        %p491 = scmp.eq.s32.totalorder %s41, 0
        %p492 = scmp.eq.s32.totalorder %s41, 1
        // Predicated region
        $region77: #{tpu_custom_call.1} parent=47 // pred_check
          %p493 = pneg %p491
        $region78: #{tpu_custom_call.1} parent=47 // pred_check_branch
          %495 = sbr.rel (%p493) target = $region80
        $region79: #{tpu_custom_call.1} parent=47 // pred_region
          %v496 = vld [vmem:[%s401] sm:$0xff]
          %v497 = vld [vmem:[#allocation10] sm:$0x1]
          %v498 = vld [vmem:[#allocation12] sm:$0x1]
          %vm499 = vcmask 261120
          %v500 = vsel %vm499, %v496, 0.0
          %501 = vadd.xlane.f32.xlu0 %v500
          %v502 = vpop.xlane.xlu0 %501
          %v503 = vrcp.pop 32.0
          %v504 = vmul.f32 %v502, %v503
          %v505 = vsub.f32 %v496, %v504
          %v506 = vmul.f32 %v505, %v505
          %v507 = vsel %vm499, %v506, 0.0
          %508 = vadd.xlane.f32.xlu0 %v507
          %v509 = vpop.xlane.xlu0 %508
          %v510 = vmul.f32 %v509, %v503
          %v511 = vadd.f32 %v510, 1e-05
          %v512 = vrsqrt.pop %v511
          %v513 = vmul.f32 %v505, %v512
          %v515 = vlaneseq
          %v516 = vshrl.u32 %v515, 7
          %v517 = vsub.s32 0, %v516
          %v518 = vrot.slane %v497, %v517
          %v520 = vmul.f32 %v513, %v518
          %v522 = vlaneseq
          %v523 = vshrl.u32 %v522, 7
          %v524 = vsub.s32 0, %v523
          %v525 = vrot.slane %v498, %v524
          %v527 = vadd.f32 %v520, %v525
          %vm528 = vcmask 261127
          %529 = vst.msk [vmem:[%s489 - $0x7] sm:$0x80] %vm528, %v527
          %v530 = vld [vmem:[%s409] sm:$0x1]
          %v532 = vrot.slane %v527, 7
          %vm534 = vcmask 1040384
          %v535 = vsel %vm534, %v530, %v532
          %v536 = vld [vmem:[#allocation9] sm:$0x1]
          %v537 = vsub.f32 %v535, %v527
          %v539 = vlaneseq
          %v540 = vshrl.u32 %v539, 7
          %v541 = vsub.s32 0, %v540
          %v542 = vrot.slane %v536, %v541
          %v544 = vmul.f32 %v537, %v542
          %v545 = vadd.f32 %v527, %v544
          %546 = vst.msk [vmem:[#allocation2] sm:$0xff] %vm499, %v545
        $region80: #{tpu_custom_call.1} parent=47 // pred_fallthru
          _
        %v547 = vld [vmem:[#allocation2] sm:$0xff]
        %v548 = vld [vmem:[%s430] sm:$0xff]
        %v549 = vld [vmem:[%s430 + $0x8] sm:$0xff]
        %v550 = vld [vmem:[%s430 + $0x10] sm:$0xff]
        %v551 = vld [vmem:[%s430 + $0x18] sm:$0xff]
        %vm552 = vcmask 261120
        %v554 = vsel %vm552, %v547, 0
        %556 = vmatprep.subr.mxu0 0.0
        %557 = vmatpush1.msra.mxu0 %v548
        %558 = vmatprep.subr.mxu0 0.0
        %559 = vmatpush1.msra.mxu0 %v549
        %560 = vmatprep.subr.mxu0 0.0
        %561 = vmatpush1.msra.mxu0 %v550
        %562 = vmatprep.subr.mxu0 0.0
        %563 = vmatpush1.msra.mxu0 %v551
        %564 = vmatprep.subr.mxu0 0.0
        %565 = vmatpush1.msra.mxu0 0.0
        %566 = vmatprep.subr.mxu0 0.0
        %567 = vmatpush1.msra.mxu0 0.0
        %568 = vmatprep.subr.mxu0 0.0
        %569 = vmatpush1.msra.mxu0 0.0
        %570 = vmatprep.subr.mxu0 0.0
        %571 = vmatpush1.msra.mxu0 0.0
        %572 = vmatprep.subr.mxu0 0.0
        %573 = vmatpush1.msra.mxu0 0.0
        %574 = vmatprep.subr.mxu0 0.0
        %575 = vmatpush1.msra.mxu0 0.0
        %576 = vmatprep.subr.mxu0 0.0
        %577 = vmatpush1.msra.mxu0 0.0
        %578 = vmatprep.subr.mxu0 0.0
        %579 = vmatpush1.msra.mxu0 0.0
        %580 = vmatprep.subr.mxu0 0.0
        %581 = vmatpush1.msra.mxu0 0.0
        %582 = vmatprep.subr.mxu0 0.0
        %583 = vmatpush1.msra.mxu0 0.0
        %584 = vmatprep.subr.mxu0 0.0
        %585 = vmatpush1.msra.mxu0 0.0
        %586 = vmatprep.subr.mxu0 0.0
        %587 = vmatpush1.msra.mxu0 0.0
        %588 = vmatprep.subr.mxu0 0.0
        %589 = vmatpush1.msra.mxu0 0.0
        %590 = vmatprep.subr.mxu0 0.0
        %591 = vmatpush1.msra.mxu0 0.0
        %592 = vmatprep.subr.mxu0 0.0
        %593 = vmatpush1.msra.mxu0 0.0
        %594 = vmatprep.subr.mxu0 0.0
        %595 = vmatpush1.msra.mxu0 0.0
        %596 = vmatprep.subr.mxu0 0.0
        %597 = vmatpush1.msra.mxu0 0.0
        %598 = vmatprep.subr.mxu0 0.0
        %599 = vmatpush1.msra.mxu0 0.0
        %600 = vmatprep.subr.mxu0 0.0
        %601 = vmatpush1.msra.mxu0 0.0
        %602 = vmatprep.subr.mxu0 0.0
        %603 = vmatpush1.msra.mxu0 0.0
        %604 = vmatprep.subr.mxu0 0.0
        %605 = vmatpush1.msra.mxu0 0.0
        %606 = vmatprep.subr.mxu0 0.0
        %607 = vmatpush1.msra.mxu0 0.0
        %608 = vmatprep.subr.mxu0 0.0
        %609 = vmatpush1.msra.mxu0 0.0
        %610 = vmatprep.subr.mxu0 0.0
        %611 = vmatpush1.msra.mxu0 0.0
        %612 = vmatprep.subr.mxu0 0.0
        %613 = vmatpush1.msra.mxu0 0.0
        %614 = vmatprep.subr.mxu0 0.0
        %615 = vmatpush1.msra.mxu0 0.0
        %616 = vmatprep.subr.mxu0 0.0
        %617 = vmatpush1.msra.mxu0 0.0
        %618 = vmatprep.subr.mxu0 0.0
        %619 = vmatpush1.msra.mxu0 0.0
        %620 = vmatprep.mubr.f32.mxu0 0.0
        %621 = vmatmul.mubr.f32.gmra.mrb[0].mxu0 %v554
        %v622 = vpop.f32.mrb[0].mxu0
        %v623 = vadd.f32 0.0, %v622
        %v624 = vpop.f32.mrb[0].mxu0
        %625 = vdwg.mxu0
        %v626 = vmax.f32 %v623, 0.0
        %v627 = vmul.f32 %v626, %v626
        %v628 = vld [vmem:[%s439] sm:$0xff]
        %v629 = vld [vmem:[%s439 + $0x8] sm:$0xff]
        %v630 = vld [vmem:[%s439 + $0x10] sm:$0xff]
        %v631 = vld [vmem:[%s439 + $0x18] sm:$0xff]
        %v632 = vld [vmem:[%s439 + $0x20] sm:$0xff]
        %v633 = vld [vmem:[%s439 + $0x28] sm:$0xff]
        %v634 = vld [vmem:[%s439 + $0x30] sm:$0xff]
        %v635 = vld [vmem:[%s439 + $0x38] sm:$0xff]
        %v636 = vld [vmem:[%s439 + $0x40] sm:$0xff]
        %v637 = vld [vmem:[%s439 + $0x48] sm:$0xff]
        %v638 = vld [vmem:[%s439 + $0x50] sm:$0xff]
        %v639 = vld [vmem:[%s439 + $0x58] sm:$0xff]
        %v640 = vld [vmem:[%s439 + $0x60] sm:$0xff]
        %v641 = vld [vmem:[%s439 + $0x68] sm:$0xff]
        %v642 = vld [vmem:[%s439 + $0x70] sm:$0xff]
        %v643 = vld [vmem:[%s439 + $0x78] sm:$0xff]
        %644 = vmatprep.subr.mxu0 0.0
        %645 = vmatpush1.msra.mxu0 %v628
        %646 = vmatprep.subr.mxu0 0.0
        %647 = vmatpush1.msra.mxu0 %v629
        %648 = vmatprep.subr.mxu0 0.0
        %649 = vmatpush1.msra.mxu0 %v630
        %650 = vmatprep.subr.mxu0 0.0
        %651 = vmatpush1.msra.mxu0 %v631
        %652 = vmatprep.subr.mxu0 0.0
        %653 = vmatpush1.msra.mxu0 %v632
        %654 = vmatprep.subr.mxu0 0.0
        %655 = vmatpush1.msra.mxu0 %v633
        %656 = vmatprep.subr.mxu0 0.0
        %657 = vmatpush1.msra.mxu0 %v634
        %658 = vmatprep.subr.mxu0 0.0
        %659 = vmatpush1.msra.mxu0 %v635
        %660 = vmatprep.subr.mxu0 0.0
        %661 = vmatpush1.msra.mxu0 %v636
        %662 = vmatprep.subr.mxu0 0.0
        %663 = vmatpush1.msra.mxu0 %v637
        %664 = vmatprep.subr.mxu0 0.0
        %665 = vmatpush1.msra.mxu0 %v638
        %666 = vmatprep.subr.mxu0 0.0
        %667 = vmatpush1.msra.mxu0 %v639
        %668 = vmatprep.subr.mxu0 0.0
        %669 = vmatpush1.msra.mxu0 %v640
        %670 = vmatprep.subr.mxu0 0.0
        %671 = vmatpush1.msra.mxu0 %v641
        %672 = vmatprep.subr.mxu0 0.0
        %673 = vmatpush1.msra.mxu0 %v642
        %674 = vmatprep.subr.mxu0 0.0
        %675 = vmatpush1.msra.mxu0 %v643
        %676 = vmatprep.subr.mxu0 0.0
        %677 = vmatpush1.msra.mxu0 0.0
        %678 = vmatprep.subr.mxu0 0.0
        %679 = vmatpush1.msra.mxu0 0.0
        %680 = vmatprep.subr.mxu0 0.0
        %681 = vmatpush1.msra.mxu0 0.0
        %682 = vmatprep.subr.mxu0 0.0
        %683 = vmatpush1.msra.mxu0 0.0
        %684 = vmatprep.subr.mxu0 0.0
        %685 = vmatpush1.msra.mxu0 0.0
        %686 = vmatprep.subr.mxu0 0.0
        %687 = vmatpush1.msra.mxu0 0.0
        %688 = vmatprep.subr.mxu0 0.0
        %689 = vmatpush1.msra.mxu0 0.0
        %690 = vmatprep.subr.mxu0 0.0
        %691 = vmatpush1.msra.mxu0 0.0
        %692 = vmatprep.subr.mxu0 0.0
        %693 = vmatpush1.msra.mxu0 0.0
        %694 = vmatprep.subr.mxu0 0.0
        %695 = vmatpush1.msra.mxu0 0.0
        %696 = vmatprep.subr.mxu0 0.0
        %697 = vmatpush1.msra.mxu0 0.0
        %698 = vmatprep.subr.mxu0 0.0
        %699 = vmatpush1.msra.mxu0 0.0
        %700 = vmatprep.subr.mxu0 0.0
        %701 = vmatpush1.msra.mxu0 0.0
        %702 = vmatprep.subr.mxu0 0.0
        %703 = vmatpush1.msra.mxu0 0.0
        %704 = vmatprep.subr.mxu0 0.0
        %705 = vmatpush1.msra.mxu0 0.0
        %706 = vmatprep.subr.mxu0 0.0
        %707 = vmatpush1.msra.mxu0 0.0
        %708 = vmatprep.mubr.f32.mxu0 0.0
        %709 = vmatmul.mubr.f32.gmra.mrb[0].mxu0 %v627
        %v710 = vpop.f32.mrb[0].mxu0
        %v711 = vadd.f32 0.0, %v710
        %v712 = vpop.f32.mrb[0].mxu0
        %713 = vdwg.mxu0
        // Predicated region
        $region81: #{tpu_custom_call.1} parent=47 // pred_check
          %p714 = pneg %p491
        $region82: #{tpu_custom_call.1} parent=47 // pred_check_branch
          %716 = sbr.rel (%p714) target = $region84
        $region83: #{tpu_custom_call.1} parent=47 // pred_region
          %717 = vst.msk [vmem:[#allocation3] sm:$0xff] %vm552, %v711
        $region84: #{tpu_custom_call.1} parent=47 // pred_fallthru
          _
        %p718 = scmp.ne.s32.totalorder %s41, 0
        // Predicated region
        $region85: #{tpu_custom_call.1} parent=47 // pred_check
          %p719 = pneg %p718
        $region86: #{tpu_custom_call.1} parent=47 // pred_check_branch
          %721 = sbr.rel (%p719) target = $region88
        $region87: #{tpu_custom_call.1} parent=47 // pred_region
          %v722 = vld [vmem:[#allocation3] sm:$0xff]
          %v723 = vadd.f32 %v722, %v711
          %724 = vst.msk [vmem:[#allocation3] sm:$0xff] %vm552, %v723
        $region88: #{tpu_custom_call.1} parent=47 // pred_fallthru
          _
        // Predicated region
        $region89: #{tpu_custom_call.1} parent=47 // pred_check
          %p725 = pneg %p492
        $region90: #{tpu_custom_call.1} parent=47 // pred_check_branch
          %727 = sbr.rel (%p725) target = $region92
        $region91: #{tpu_custom_call.1} parent=47 // pred_region
          %v728 = vld [vmem:[#allocation3] sm:$0xff]
          %v729 = vld [vmem:[%s401] sm:$0xff]
          %v730 = vadd.f32 %v728, %v729
          %731 = vst.msk [vmem:[%s483] sm:$0xff] %vm552, %v730
        $region92: #{tpu_custom_call.1} parent=47 // pred_fallthru
          _
        %s732 = sand.u32 %s223, 1
        %s733 = scalar_lea.sflag [#allocation6], %s732
        %s734 = sand.u32 %s223, 1
        %s735 = smul.addr %s734, 8
        %s736 = scalar_lea.vmem [#allocation16], %s735
        %s737 = sand.u32 %s249, 1
        %s738 = scalar_lea.sflag [#allocation18], %s737
        %s739 = sand.u32 %s249, 1
        %s740 = scalar_lea.vmem [#allocation17], %s739
        // Predicated region
        $region93: #{tpu_custom_call.1} parent=47 // pred_check
          %p741 = pneg %p233
        $region94: #{tpu_custom_call.1} parent=47 // pred_check_branch
          %743 = sbr.rel (%p741) target = $region96
        $region95: #{tpu_custom_call.1} parent=47 // pred_region
          %s745 = ssub.s32 128, 128
          %746 = vsyncadd %s733, %s745
          %s747 = smul.addr %s40, 128
          %s748 = scalar_lea.hbm %s7, %s747
          %s750 = sshll.u32 %s736, 4
          %s751 = int_to_ptr.vmem [resolvable:$true] %s750
          %753 = dma.vmem_to_hbm [thread:$0]  %s751, 128, %s748, %s733
        $region96: #{tpu_custom_call.1} parent=47 // pred_fallthru
          _
        // Predicated region
        $region97: #{tpu_custom_call.1} parent=47 // pred_check
          %p754 = pneg %p259
        $region98: #{tpu_custom_call.1} parent=47 // pred_check_branch
          %756 = sbr.rel (%p754) target = $region100
        $region99: #{tpu_custom_call.1} parent=47 // pred_region
          %s758 = ssub.s32 16, 16
          %759 = vsyncadd %s738, %s758
          %s760 = smul.addr %s40, 16
          %s761 = scalar_lea.hbm %s8, %s760
          %s763 = sshll.u32 %s740, 4
          %s764 = int_to_ptr.vmem [resolvable:$true] %s763
          %766 = dma.vmem_to_hbm [thread:$0]  %s764, 16, %s761, %s738
        $region100: #{tpu_custom_call.1} parent=47 // pred_fallthru
          _
      $region48: #{tpu_custom_call.1} parent=5 // pred_fallthru
        _
      %p767 = scmp.le.s32.totalorder 2, %s31
      // Predicated region
      $region101: #{tpu_custom_call.1} parent=5 // pred_check
        %p768 = pneg %p767
      $region102: #{tpu_custom_call.1} parent=5 // pred_check_branch
        %770 = sbr.rel (%p768) target = $region104
      $region103: #{tpu_custom_call.1} parent=5 // pred_region
        %s771 = ssub.s32 %s31, 2
        // Predicated region
        $region105: #{tpu_custom_call.1} parent=103 // pred_check
          %p772 = pneg %p239
        $region106: #{tpu_custom_call.1} parent=103 // pred_check_branch
          %774 = sbr.rel (%p772) target = $region108
        $region107: #{tpu_custom_call.1} parent=103 // pred_region
          %s775 = sand.u32 %s224, 1
          %s776 = scalar_lea.sflag [#allocation6], %s775
          %s777 = sand.u32 %s224, 1
          %s778 = smul.addr %s777, 8
          %s779 = scalar_lea.vmem [#allocation16], %s778
          %780 = dma.done %s776, 128
        $region108: #{tpu_custom_call.1} parent=103 // pred_fallthru
          _
        // Predicated region
        $region109: #{tpu_custom_call.1} parent=103 // pred_check
          %p781 = pneg %p265
        $region110: #{tpu_custom_call.1} parent=103 // pred_check_branch
          %783 = sbr.rel (%p781) target = $region112
        $region111: #{tpu_custom_call.1} parent=103 // pred_region
          %s784 = sand.u32 %s250, 1
          %s785 = scalar_lea.sflag [#allocation18], %s784
          %s786 = sand.u32 %s250, 1
          %s787 = scalar_lea.vmem [#allocation17], %s786
          %788 = dma.done %s785, 16
        $region112: #{tpu_custom_call.1} parent=103 // pred_fallthru
          _
      $region104: #{tpu_custom_call.1} parent=5 // pred_fallthru
        _
    $region6: #{tpu_custom_call.1} parent=1 // loop_footer
      %s35 = sadd.s32 1, %s31
    $region7: #{tpu_custom_call.1} parent=1 // loop_footer_branch
      %30 = sbr.rel target = $region3
    $region8: #{tpu_custom_call.1} parent=1 // loop_exit
      _
    %789 = vsyncpa [#allocation5], 1
    %s790 = scalar_lea.sflag [#allocation5], 1
    %791 = vsyncpa %s790, 1
    %792 = vsyncpa [#allocation8], 1
    %s793 = scalar_lea.sflag [#allocation8], 1
    %794 = vsyncpa %s793, 1
    %795 = vsyncpa [#allocation11], 1
    %796 = vsyncpa [#allocation14], 1
    %s797 = scalar_lea.sflag [#allocation14], 1
    %798 = vsyncpa %s797, 1
    %799 = vsyncpa [#allocation6], 1
    %s800 = scalar_lea.sflag [#allocation6], 1
    %801 = vsyncpa %s800, 1
    %802 = vsyncpa [#allocation18], 1
    %s803 = scalar_lea.sflag [#allocation18], 1
    %804 = vsyncpa %s803, 1

</llo_original>
